<compile_context>
chip_gen: v5e
topology: v5e:2x2
jax: 0.10.0
libtpu: 0.0.40
codegen_flags: <defaults>
</compile_context>

<pallas_src>
import functools

import jax
import jax.numpy as jnp
from jax.experimental import pallas as pl
from jax.experimental.pallas import tpu as pltpu


class Config:
    model_dim = 8
    num_routers = 1
    num_adapters = 8
    routing_estimator = "gs_st_routing"
    use_load_balancing = False
    normalize_router_weights = False
    cosine_router = False
    no_router_bias = False
    router_init_scale = 0.5


def _router_kernel(x_ref, params_ref, rhs_ref, out_ref, *, C, A, OUT_W):
    # x_ref:      (TB, C*HW)   lane-dense input slab (bf16 or f32)
    # params_ref: (3, P)       row0[:C]=BN scale, row1[:C]=BN shift, row2[:A]=folded bias b'
    # rhs_ref:    (C*HW, C+A)  [block-diag 1/HW  |  W'/HW tiled over HW]   (resident)
    # out_ref:    (TB, OUT_W)  packed [new_x | logits | probs | 0-pad], OUT_W multiple of 128
    #
    # One MXU matmul fuses the spatial mean and the router projection; f32 accumulation.
    y = jnp.dot(x_ref[...], rhs_ref[...], preferred_element_type=jnp.float32)  # (TB, C+A)

    pooled = y[:, 0:C]                                     # mean over H*W
    scale = params_ref[0:1, 0:C]
    shift = params_ref[1:2, 0:C]
    new_x = pooled * scale + shift                         # eval BatchNorm2d after the mean

    logits = y[:, C:C + A] + params_ref[2:3, 0:A]          # pooled @ W' + b'

    # Numerically stable softmax; reciprocal on the EUP (approx -> not bit-exact vs torch).
    m = jnp.max(logits, axis=-1, keepdims=True)
    e = jnp.exp(logits - m)
    denom = jnp.sum(e, axis=-1, keepdims=True)
    probs = e * pl.reciprocal(denom, approx=True)

    # Single unmasked 128-lane store per grid step.
    pieces = [new_x, logits, probs]
    pad_w = OUT_W - (C + 2 * A)
    if pad_w > 0:
        pieces.append(jnp.zeros((new_x.shape[0], pad_w), jnp.float32))
    out_ref[...] = jnp.concatenate(pieces, axis=-1)


def _choose_batch_tile(B, bytes_per_row, max_tile=1024):
    """Generation-aware batch tile: as big as the VMEM budget allows, >=2 steps when possible."""
    try:
        vmem_cap = int(pltpu.get_tpu_info().vmem_capacity_bytes)
    except Exception:
        vmem_cap = 64 * 1024 * 1024            # v7x per-TC size: safe lower bound everywhere
    budget = min(48 * 1024 * 1024, vmem_cap // 2)
    tb = budget // (2 * max(1, bytes_per_row))  # double-buffered x tile dominates VMEM
    tb = max(8, min(tb, max_tile))
    if B >= 16:
        # Keep >= 2 grid steps so dimension_semantics=("parallel",) can use both v7x TCs.
        tb = min(tb, max(8, (B // 2) // 8 * 8))
    if tb >= B:
        return B, vmem_cap                      # single full-batch tile (block dim == array dim)
    return max(8, (tb // 8) * 8), vmem_cap      # multiple of 8 for the sublane constraint


def router_forward(x_nchw, bn_gamma, bn_beta, bn_mean, bn_var,
                   router_w, router_b, eps=1e-5,
                   compute_dtype=jnp.bfloat16, max_batch_tile=1024):
    """Fold BN into the router weights, build the fused pooling/projection rhs, run the kernel."""
    B, C, H, W = x_nchw.shape
    R, C_w, A = router_w.shape
    assert R == 1 and C_w == C, "forward() is only shape-consistent for num_routers == 1"
    HW = H * W
    CHW = C * HW

    # Lane-dense 2-D slab; optional bf16 cast halves HBM traffic (MXU accumulates in f32).
    x2 = x_nchw.reshape(B, CHW)
    if compute_dtype is not None:
        x2 = x2.astype(compute_dtype)

    # Eval BatchNorm2d == per-channel affine; fold it into the router weights.
    scale = (bn_gamma / jnp.sqrt(bn_var + eps)).astype(jnp.float32)            # (C,)
    shift = (bn_beta - bn_mean * scale).astype(jnp.float32)                    # (C,)
    w0 = router_w[0].astype(jnp.float32)                                       # (C, A)
    b0 = router_b[0].astype(jnp.float32)                                       # (A,)
    w_fold = scale[:, None] * w0                                               # (C, A)
    b_fold = shift @ w0 + b0                                                   # (A,)

    # Fused rhs: first C cols give pooled, last A cols give pooled @ W'.
    pool_block = jnp.repeat(jnp.eye(C, dtype=jnp.float32), HW, axis=0) / HW    # (C*HW, C)
    proj_block = jnp.repeat(w_fold, HW, axis=0) / HW                           # (C*HW, A)
    rhs = jnp.concatenate([pool_block, proj_block], axis=1).astype(x2.dtype)   # (C*HW, C+A)

    # Tiny resident params: scale / shift / folded bias, padded to a common width.
    P = max(C, A)
    params = jnp.zeros((3, P), jnp.float32)
    params = params.at[0, :C].set(scale).at[1, :C].set(shift).at[2, :A].set(b_fold)

    OUT_W = max(128, ((C + 2 * A + 127) // 128) * 128)     # lane-padded packed output width

    bytes_per_row = CHW * x2.dtype.itemsize
    TB, vmem_cap = _choose_batch_tile(B, bytes_per_row, max_batch_tile)
    grid = (pl.cdiv(B, TB),)

    # Explicit VMEM limit derived from the actual double-buffered footprint (+ headroom),
    # capped well below physical capacity (v7x: 64 MiB; v5e/v6e: 128 MiB).
    x_tile_bytes = TB * bytes_per_row
    out_tile_bytes = TB * OUT_W * 4
    rhs_vmem_bytes = CHW * 128 * rhs.dtype.itemsize        # lane-padded resident estimate
    est = 2 * (x_tile_bytes + out_tile_bytes + rhs_vmem_bytes) + (4 << 20)
    vmem_limit = int(min(vmem_cap * 3 // 4, max(16 << 20, est)))

    kernel = functools.partial(_router_kernel, C=C, A=A, OUT_W=OUT_W)
    packed = pl.pallas_call(
        kernel,
        grid=grid,
        in_specs=[
            pl.BlockSpec((TB, CHW), lambda i: (i, 0)),        # pipelined x tiles (only big operand)
            pl.BlockSpec((3, P), lambda i: (0, 0)),           # resident tiny params
            pl.BlockSpec((CHW, C + A), lambda i: (0, 0)),     # resident fused pooling/projection rhs
        ],
        out_specs=pl.BlockSpec((TB, OUT_W), lambda i: (i, 0)),
        out_shape=jax.ShapeDtypeStruct((B, OUT_W), jnp.float32),
        compiler_params=pltpu.CompilerParams(
            dimension_semantics=("parallel",),                # shard batch steps across TCs (v7x)
            vmem_limit_bytes=vmem_limit,
        ),
    )(x2, params, rhs)

    new_x = packed[:, 0:C]
    logits = packed[:, C:C + A]
    probs = packed[:, C + A:C + 2 * A]

    # Match PyTorch return shapes: (R, B, C), (R, B, A), (R, B, A) with R == 1.
    return new_x[None], logits[None], probs[None]


if __name__ == "__main__":
    cfg = Config()
    key = jax.random.PRNGKey(0)
    k_x, k_w, k_g, k_b, k_m, k_v = jax.random.split(key, 6)

    B, C, H, W = 2, cfg.model_dim, 16, 16          # small NCHW input
    x = jax.random.normal(k_x, (B, C, H, W), jnp.float32)

    # Deterministic parameter init (mirrors Router.__init__ shapes).
    router_w = cfg.router_init_scale * jax.random.normal(
        k_w, (cfg.num_routers, C, cfg.num_adapters), jnp.float32)   # normal_(std=init_scale)
    router_b = jnp.zeros((cfg.num_routers, cfg.num_adapters), jnp.float32)

    # BatchNorm2d (eval mode) parameters — deterministically perturbed from torch defaults.
    bn_gamma = jnp.ones((C,), jnp.float32) + 0.1 * jax.random.normal(k_g, (C,), jnp.float32)
    bn_beta = 0.1 * jax.random.normal(k_b, (C,), jnp.float32)
    bn_mean = 0.1 * jax.random.normal(k_m, (C,), jnp.float32)
    bn_var = jnp.ones((C,), jnp.float32) + 0.05 * jax.random.uniform(k_v, (C,), jnp.float32)

    new_x, logits, probs = router_forward(
        x, bn_gamma, bn_beta, bn_mean, bn_var, router_w, router_b)
    jax.block_until_ready((new_x, logits, probs))

    # Pure-JAX f32 reference (eval BN -> spatial mean -> matmul + bias -> softmax).
    eps = 1e-5
    scale = bn_gamma / jnp.sqrt(bn_var + eps)
    shift = bn_beta - bn_mean * scale
    pooled = jnp.mean(x, axis=(2, 3))
    ref_new_x = pooled * scale + shift
    ref_logits = ref_new_x @ router_w[0] + router_b[0]
    ref_probs = jax.nn.softmax(ref_logits, axis=-1)

    assert new_x.shape == (1, B, C)
    assert logits.shape == (1, B, cfg.num_adapters)
    assert probs.shape == (1, B, cfg.num_adapters)
    assert bool(jnp.all(jnp.isfinite(probs)))
    assert bool(jnp.allclose(new_x[0], ref_new_x, atol=2e-2, rtol=2e-2))
    assert bool(jnp.allclose(logits[0], ref_logits, atol=2e-2, rtol=2e-2))
    assert bool(jnp.allclose(probs[0], ref_probs, atol=2e-2, rtol=2e-2))
    print("KERNEL_OK")
</pallas_src>

<mosaic_0001>
module attributes {stable_mosaic.version = 11 : i64} {
  func.func @_router_kernel(%arg0: i32, %arg1: memref<2x2048xbf16, #tpu.memory_space<vmem>>, %arg2: memref<3x8xf32, #tpu.memory_space<vmem>>, %arg3: memref<2048x16xbf16, #tpu.memory_space<vmem>>, %arg4: memref<2x128xf32, #tpu.memory_space<vmem>>) attributes {dimension_semantics = [#tpu.dimension_semantics<parallel>], iteration_bounds = array<i64: 1>, scalar_prefetch = 0 : i64, scratch_operands = 0 : i64, tpu.core_type = #tpu.core_type<tc>, window_params = [{transform_indices = @transform_0, window_bounds = array<i64: 2, 2048>}, {pipeline_mode = #tpu.pipeline_mode<synchronous>, transform_indices = @transform_1, window_bounds = array<i64: 3, 8>}, {pipeline_mode = #tpu.pipeline_mode<synchronous>, transform_indices = @transform_2, window_bounds = array<i64: 2048, 16>}, {transform_indices = @transform_3, window_bounds = array<i64: 2, 128>}]} {
    %c0 = arith.constant 0 : index
    %c0_0 = arith.constant 0 : index
    %0 = vector.load %arg1[%c0, %c0_0] : memref<2x2048xbf16, #tpu.memory_space<vmem>>, vector<2x2048xbf16>
    %c0_1 = arith.constant 0 : index
    %c0_2 = arith.constant 0 : index
    %1 = vector.load %arg3[%c0_1, %c0_2] : memref<2048x16xbf16, #tpu.memory_space<vmem>>, vector<2048x16xbf16>
    %cst = arith.constant dense<0.000000e+00> : vector<2x16xf32>
    %2 = tpu.matmul %0, %1, %cst {dimension_numbers = #tpu.dot_dimension_numbers<[1], [0], [0], [1], [0, 0, 1, 1], [], []>} : vector<2x2048xbf16>, vector<2048x16xbf16>, vector<2x16xf32> -> vector<2x16xf32>
    %3 = vector.extract_strided_slice %2 {offsets = [0, 0], sizes = [2, 8], strides = [1, 1]} : vector<2x16xf32> to vector<2x8xf32>
    %c0_3 = arith.constant 0 : index
    %c0_4 = arith.constant 0 : index
    %4 = vector.load %arg2[%c0_3, %c0_4] : memref<3x8xf32, #tpu.memory_space<vmem>>, vector<1x8xf32>
    %c1 = arith.constant 1 : index
    %c0_5 = arith.constant 0 : index
    %5 = vector.load %arg2[%c1, %c0_5] : memref<3x8xf32, #tpu.memory_space<vmem>>, vector<1x8xf32>
    %6 = vector.broadcast %4 : vector<1x8xf32> to vector<2x8xf32>
    %7 = arith.mulf %3, %6 : vector<2x8xf32>
    %8 = vector.broadcast %5 : vector<1x8xf32> to vector<2x8xf32>
    %9 = arith.addf %7, %8 : vector<2x8xf32>
    %10 = vector.extract_strided_slice %2 {offsets = [0, 8], sizes = [2, 8], strides = [1, 1]} : vector<2x16xf32> to vector<2x8xf32>
    %c2 = arith.constant 2 : index
    %c0_6 = arith.constant 0 : index
    %11 = vector.load %arg2[%c2, %c0_6] : memref<3x8xf32, #tpu.memory_space<vmem>>, vector<1x8xf32>
    %12 = vector.broadcast %11 : vector<1x8xf32> to vector<2x8xf32>
    %13 = arith.addf %10, %12 : vector<2x8xf32>
    %cst_7 = arith.constant dense<0xFF800000> : vector<2xf32>
    %14 = vector.multi_reduction <maximumf>, %13, %cst_7 [1] : vector<2x8xf32> to vector<2xf32>
    %15 = vector.shape_cast %14 : vector<2xf32> to vector<2x1xf32>
    %16 = vector.broadcast %15 : vector<2x1xf32> to vector<2x8xf32>
    %17 = arith.subf %13, %16 : vector<2x8xf32>
    %18 = math.exp %17 : vector<2x8xf32>
    %cst_8 = arith.constant dense<0.000000e+00> : vector<2xf32>
    %19 = vector.multi_reduction <add>, %18, %cst_8 [1] : vector<2x8xf32> to vector<2xf32>
    %20 = vector.shape_cast %19 : vector<2xf32> to vector<2x1xf32>
    %21 = tpu.reciprocal %20 {approx = true} : vector<2x1xf32> -> vector<2x1xf32>
    %22 = vector.broadcast %21 : vector<2x1xf32> to vector<2x8xf32>
    %23 = arith.mulf %18, %22 : vector<2x8xf32>
    %cst_9 = arith.constant 0.000000e+00 : f32
    %24 = vector.broadcast %cst_9 : f32 to vector<2x104xf32>
    %25 = tpu.concatenate %9, %13, %23, %24 in 1 : vector<2x8xf32>, vector<2x8xf32>, vector<2x8xf32>, vector<2x104xf32> -> vector<2x128xf32>
    %c0_10 = arith.constant 0 : index
    %c0_11 = arith.constant 0 : index
    %26 = vector.load %arg4[%c0_10, %c0_11] : memref<2x128xf32, #tpu.memory_space<vmem>>, vector<2x128xf32>
    tpu.vector_store %arg4[%c0_10, %c0_11], %25 {strides = array<i32>} : memref<2x128xf32, #tpu.memory_space<vmem>>, vector<2x128xf32>,
    return
  }
  func.func @transform_0(%arg0: i32) -> (i32, i32) {
    %c0_i32 = arith.constant 0 : i32
    %c0_i32_0 = arith.constant 0 : i32
    return %arg0, %c0_i32 : i32, i32
  }
  func.func @transform_1(%arg0: i32) -> (i32, i32) {
    %c0_i32 = arith.constant 0 : i32
    %c0_i32_0 = arith.constant 0 : i32
    %c0_i32_1 = arith.constant 0 : i32
    return %c0_i32, %c0_i32_0 : i32, i32
  }
  func.func @transform_2(%arg0: i32) -> (i32, i32) {
    %c0_i32 = arith.constant 0 : i32
    %c0_i32_0 = arith.constant 0 : i32
    %c0_i32_1 = arith.constant 0 : i32
    return %c0_i32, %c0_i32_0 : i32, i32
  }
  func.func @transform_3(%arg0: i32) -> (i32, i32) {
    %c0_i32 = arith.constant 0 : i32
    %c0_i32_0 = arith.constant 0 : i32
    return %arg0, %c0_i32 : i32, i32
  }
}

</mosaic_0001>

<llo_original>
// kernel: tpu_custom_call.1
$region0: #{tpu_custom_call.1}
  #allocation0 [shape = 'u32[]', space=smem, size = 0x4, offset = 0x4, fixed_abs, tag = 'smem constant byte address 0x4 - core index']
  #allocation1 [shape = 'u32[72,128]{1,0:T(1,128)}', space=vmem, size = 0x9000, scoped, tag = 'internal scratch']
  %s0 = inlined_call_operand.vmem [shape: bf16[2,2048], index: 0, kind: input, shape index: {}]
  %s1 = inlined_call_operand.vmem [shape: f32[3,8], index: 1, kind: input, shape index: {}]
  %s2 = inlined_call_operand.vmem [shape: bf16[2048,16], index: 2, kind: input, shape index: {}]
  %s3 = inlined_call_operand.hbm [shape: f32[2,128], index: 3, kind: output, shape index: {}]
  %s4 = sld [smem:[#allocation0]]
  $region22: #{tpu_custom_call.1} parent=0
    _
  %s6 = ssub.s32 1, %s4
  %s7 = scalar_select 0, %s6, %s4
  $region1: #{tpu_custom_call.1} parent=0
    #allocation2 [shape = 'u8[1024]{0}', space=vmem, size = 0x400, scoped, tag = 'output window, operand 0, single buffered']
    #allocation3 [shape = 's32[1]{0}', space=sflag, size = 0x4, scoped, tag = 'scoped memory for tpu_custom_call.1']
    %8 = vsyncpa [#allocation3], 0
    // Predicated region
    $region2: #{tpu_custom_call.1} parent=1 // pred_check
      _
    $region3: #{tpu_custom_call.1} parent=1 // pred_check_branch
      %10 = sbr.rel (0) target = $region5
    $region4: #{tpu_custom_call.1} parent=1 // pred_region
      _
    $region5: #{tpu_custom_call.1} parent=1 // pred_fallthru
      _
    // Predicated region
    $region6: #{tpu_custom_call.1} parent=1 // pred_check
      _
    $region7: #{tpu_custom_call.1} parent=1 // pred_check_branch
      %12 = sbr.rel (0) target = $region9
    $region8: #{tpu_custom_call.1} parent=1 // pred_region
      _
    $region9: #{tpu_custom_call.1} parent=1 // pred_fallthru
      _
    // Predicated region
    $region10: #{tpu_custom_call.1} parent=1 // pred_check
      _
    $region11: #{tpu_custom_call.1} parent=1 // pred_check_branch
      %14 = sbr.rel (0) target = $region13
    $region12: #{tpu_custom_call.1} parent=1 // pred_region
      _
    $region13: #{tpu_custom_call.1} parent=1 // pred_fallthru
      _
    %v15 = vld [vmem:[%s0] sm:$0xff]
    %v16 = vld [vmem:[%s0 + $0x8] sm:$0xff]
    %v17 = vld [vmem:[%s2] sm:$0xf]
    %v18 = vld [vmem:[%s2 + $0x4] sm:$0xf]
    %v19 = vld [vmem:[%s2 + $0x8] sm:$0xf]
    %v20 = vld [vmem:[%s2 + $0xc] sm:$0xf]
    %v21 = vld [vmem:[%s2 + $0x10] sm:$0xf]
    %v22 = vld [vmem:[%s2 + $0x14] sm:$0xf]
    %v23 = vld [vmem:[%s2 + $0x18] sm:$0xf]
    %v24 = vld [vmem:[%s2 + $0x1c] sm:$0xf]
    %v25 = vld [vmem:[%s2 + $0x20] sm:$0xf]
    %v26 = vld [vmem:[%s2 + $0x24] sm:$0xf]
    %v27 = vld [vmem:[%s2 + $0x28] sm:$0xf]
    %v28 = vld [vmem:[%s2 + $0x2c] sm:$0xf]
    %v29 = vld [vmem:[%s2 + $0x30] sm:$0xf]
    %v30 = vld [vmem:[%s2 + $0x34] sm:$0xf]
    %v31 = vld [vmem:[%s2 + $0x38] sm:$0xf]
    %v32 = vld [vmem:[%s2 + $0x3c] sm:$0xf]
    %v33 = vld [vmem:[%s2 + $0x40] sm:$0xf]
    %v34 = vld [vmem:[%s2 + $0x44] sm:$0xf]
    %v35 = vld [vmem:[%s2 + $0x48] sm:$0xf]
    %v36 = vld [vmem:[%s2 + $0x4c] sm:$0xf]
    %v37 = vld [vmem:[%s2 + $0x50] sm:$0xf]
    %v38 = vld [vmem:[%s2 + $0x54] sm:$0xf]
    %v39 = vld [vmem:[%s2 + $0x58] sm:$0xf]
    %v40 = vld [vmem:[%s2 + $0x5c] sm:$0xf]
    %v41 = vld [vmem:[%s2 + $0x60] sm:$0xf]
    %v42 = vld [vmem:[%s2 + $0x64] sm:$0xf]
    %v43 = vld [vmem:[%s2 + $0x68] sm:$0xf]
    %v44 = vld [vmem:[%s2 + $0x6c] sm:$0xf]
    %v45 = vld [vmem:[%s2 + $0x70] sm:$0xf]
    %v46 = vld [vmem:[%s2 + $0x74] sm:$0xf]
    %v47 = vld [vmem:[%s2 + $0x78] sm:$0xf]
    %v48 = vld [vmem:[%s2 + $0x7c] sm:$0xf]
    %v49 = vld [vmem:[%s2 + $0x80] sm:$0xf]
    %v50 = vld [vmem:[%s2 + $0x84] sm:$0xf]
    %v51 = vld [vmem:[%s2 + $0x88] sm:$0xf]
    %v52 = vld [vmem:[%s2 + $0x8c] sm:$0xf]
    %v53 = vld [vmem:[%s2 + $0x90] sm:$0xf]
    %v54 = vld [vmem:[%s2 + $0x94] sm:$0xf]
    %v55 = vld [vmem:[%s2 + $0x98] sm:$0xf]
    %v56 = vld [vmem:[%s2 + $0x9c] sm:$0xf]
    %v57 = vld [vmem:[%s2 + $0xa0] sm:$0xf]
    %v58 = vld [vmem:[%s2 + $0xa4] sm:$0xf]
    %v59 = vld [vmem:[%s2 + $0xa8] sm:$0xf]
    %v60 = vld [vmem:[%s2 + $0xac] sm:$0xf]
    %v61 = vld [vmem:[%s2 + $0xb0] sm:$0xf]
    %v62 = vld [vmem:[%s2 + $0xb4] sm:$0xf]
    %v63 = vld [vmem:[%s2 + $0xb8] sm:$0xf]
    %v64 = vld [vmem:[%s2 + $0xbc] sm:$0xf]
    %v65 = vld [vmem:[%s2 + $0xc0] sm:$0xf]
    %v66 = vld [vmem:[%s2 + $0xc4] sm:$0xf]
    %v67 = vld [vmem:[%s2 + $0xc8] sm:$0xf]
    %v68 = vld [vmem:[%s2 + $0xcc] sm:$0xf]
    %v69 = vld [vmem:[%s2 + $0xd0] sm:$0xf]
    %v70 = vld [vmem:[%s2 + $0xd4] sm:$0xf]
    %v71 = vld [vmem:[%s2 + $0xd8] sm:$0xf]
    %v72 = vld [vmem:[%s2 + $0xdc] sm:$0xf]
    %v73 = vld [vmem:[%s2 + $0xe0] sm:$0xf]
    %v74 = vld [vmem:[%s2 + $0xe4] sm:$0xf]
    %v75 = vld [vmem:[%s2 + $0xe8] sm:$0xf]
    %v76 = vld [vmem:[%s2 + $0xec] sm:$0xf]
    %v77 = vld [vmem:[%s2 + $0xf0] sm:$0xf]
    %v78 = vld [vmem:[%s2 + $0xf4] sm:$0xf]
    %v79 = vld [vmem:[%s2 + $0xf8] sm:$0xf]
    %v80 = vld [vmem:[%s2 + $0xfc] sm:$0xf]
    %v81 = vld [vmem:[%s2 + $0x100] sm:$0xf]
    %v82 = vld [vmem:[%s2 + $0x104] sm:$0xf]
    %v83 = vld [vmem:[%s2 + $0x108] sm:$0xf]
    %v84 = vld [vmem:[%s2 + $0x10c] sm:$0xf]
    %v85 = vld [vmem:[%s2 + $0x110] sm:$0xf]
    %v86 = vld [vmem:[%s2 + $0x114] sm:$0xf]
    %v87 = vld [vmem:[%s2 + $0x118] sm:$0xf]
    %v88 = vld [vmem:[%s2 + $0x11c] sm:$0xf]
    %v89 = vld [vmem:[%s2 + $0x120] sm:$0xf]
    %v90 = vld [vmem:[%s2 + $0x124] sm:$0xf]
    %v91 = vld [vmem:[%s2 + $0x128] sm:$0xf]
    %v92 = vld [vmem:[%s2 + $0x12c] sm:$0xf]
    %v93 = vld [vmem:[%s2 + $0x130] sm:$0xf]
    %v94 = vld [vmem:[%s2 + $0x134] sm:$0xf]
    %v95 = vld [vmem:[%s2 + $0x138] sm:$0xf]
    %v96 = vld [vmem:[%s2 + $0x13c] sm:$0xf]
    %v97 = vld [vmem:[%s2 + $0x140] sm:$0xf]
    %v98 = vld [vmem:[%s2 + $0x144] sm:$0xf]
    %v99 = vld [vmem:[%s2 + $0x148] sm:$0xf]
    %v100 = vld [vmem:[%s2 + $0x14c] sm:$0xf]
    %v101 = vld [vmem:[%s2 + $0x150] sm:$0xf]
    %v102 = vld [vmem:[%s2 + $0x154] sm:$0xf]
    %v103 = vld [vmem:[%s2 + $0x158] sm:$0xf]
    %v104 = vld [vmem:[%s2 + $0x15c] sm:$0xf]
    %v105 = vld [vmem:[%s2 + $0x160] sm:$0xf]
    %v106 = vld [vmem:[%s2 + $0x164] sm:$0xf]
    %v107 = vld [vmem:[%s2 + $0x168] sm:$0xf]
    %v108 = vld [vmem:[%s2 + $0x16c] sm:$0xf]
    %v109 = vld [vmem:[%s2 + $0x170] sm:$0xf]
    %v110 = vld [vmem:[%s2 + $0x174] sm:$0xf]
    %v111 = vld [vmem:[%s2 + $0x178] sm:$0xf]
    %v112 = vld [vmem:[%s2 + $0x17c] sm:$0xf]
    %v113 = vld [vmem:[%s2 + $0x180] sm:$0xf]
    %v114 = vld [vmem:[%s2 + $0x184] sm:$0xf]
    %v115 = vld [vmem:[%s2 + $0x188] sm:$0xf]
    %v116 = vld [vmem:[%s2 + $0x18c] sm:$0xf]
    %v117 = vld [vmem:[%s2 + $0x190] sm:$0xf]
    %v118 = vld [vmem:[%s2 + $0x194] sm:$0xf]
    %v119 = vld [vmem:[%s2 + $0x198] sm:$0xf]
    %v120 = vld [vmem:[%s2 + $0x19c] sm:$0xf]
    %v121 = vld [vmem:[%s2 + $0x1a0] sm:$0xf]
    %v122 = vld [vmem:[%s2 + $0x1a4] sm:$0xf]
    %v123 = vld [vmem:[%s2 + $0x1a8] sm:$0xf]
    %v124 = vld [vmem:[%s2 + $0x1ac] sm:$0xf]
    %v125 = vld [vmem:[%s2 + $0x1b0] sm:$0xf]
    %v126 = vld [vmem:[%s2 + $0x1b4] sm:$0xf]
    %v127 = vld [vmem:[%s2 + $0x1b8] sm:$0xf]
    %v128 = vld [vmem:[%s2 + $0x1bc] sm:$0xf]
    %v129 = vld [vmem:[%s2 + $0x1c0] sm:$0xf]
    %v130 = vld [vmem:[%s2 + $0x1c4] sm:$0xf]
    %v131 = vld [vmem:[%s2 + $0x1c8] sm:$0xf]
    %v132 = vld [vmem:[%s2 + $0x1cc] sm:$0xf]
    %v133 = vld [vmem:[%s2 + $0x1d0] sm:$0xf]
    %v134 = vld [vmem:[%s2 + $0x1d4] sm:$0xf]
    %v135 = vld [vmem:[%s2 + $0x1d8] sm:$0xf]
    %v136 = vld [vmem:[%s2 + $0x1dc] sm:$0xf]
    %v137 = vld [vmem:[%s2 + $0x1e0] sm:$0xf]
    %v138 = vld [vmem:[%s2 + $0x1e4] sm:$0xf]
    %v139 = vld [vmem:[%s2 + $0x1e8] sm:$0xf]
    %v140 = vld [vmem:[%s2 + $0x1ec] sm:$0xf]
    %v141 = vld [vmem:[%s2 + $0x1f0] sm:$0xf]
    %v142 = vld [vmem:[%s2 + $0x1f4] sm:$0xf]
    %v143 = vld [vmem:[%s2 + $0x1f8] sm:$0xf]
    %v144 = vld [vmem:[%s2 + $0x1fc] sm:$0xf]
    %v145 = vld [vmem:[%s2 + $0x200] sm:$0xf]
    %v146 = vld [vmem:[%s2 + $0x204] sm:$0xf]
    %v147 = vld [vmem:[%s2 + $0x208] sm:$0xf]
    %v148 = vld [vmem:[%s2 + $0x20c] sm:$0xf]
    %v149 = vld [vmem:[%s2 + $0x210] sm:$0xf]
    %v150 = vld [vmem:[%s2 + $0x214] sm:$0xf]
    %v151 = vld [vmem:[%s2 + $0x218] sm:$0xf]
    %v152 = vld [vmem:[%s2 + $0x21c] sm:$0xf]
    %v153 = vld [vmem:[%s2 + $0x220] sm:$0xf]
    %v154 = vld [vmem:[%s2 + $0x224] sm:$0xf]
    %v155 = vld [vmem:[%s2 + $0x228] sm:$0xf]
    %v156 = vld [vmem:[%s2 + $0x22c] sm:$0xf]
    %v157 = vld [vmem:[%s2 + $0x230] sm:$0xf]
    %v158 = vld [vmem:[%s2 + $0x234] sm:$0xf]
    %v159 = vld [vmem:[%s2 + $0x238] sm:$0xf]
    %v160 = vld [vmem:[%s2 + $0x23c] sm:$0xf]
    %v161 = vld [vmem:[%s2 + $0x240] sm:$0xf]
    %v162 = vld [vmem:[%s2 + $0x244] sm:$0xf]
    %v163 = vld [vmem:[%s2 + $0x248] sm:$0xf]
    %v164 = vld [vmem:[%s2 + $0x24c] sm:$0xf]
    %v165 = vld [vmem:[%s2 + $0x250] sm:$0xf]
    %v166 = vld [vmem:[%s2 + $0x254] sm:$0xf]
    %v167 = vld [vmem:[%s2 + $0x258] sm:$0xf]
    %v168 = vld [vmem:[%s2 + $0x25c] sm:$0xf]
    %v169 = vld [vmem:[%s2 + $0x260] sm:$0xf]
    %v170 = vld [vmem:[%s2 + $0x264] sm:$0xf]
    %v171 = vld [vmem:[%s2 + $0x268] sm:$0xf]
    %v172 = vld [vmem:[%s2 + $0x26c] sm:$0xf]
    %v173 = vld [vmem:[%s2 + $0x270] sm:$0xf]
    %v174 = vld [vmem:[%s2 + $0x274] sm:$0xf]
    %v175 = vld [vmem:[%s2 + $0x278] sm:$0xf]
    %v176 = vld [vmem:[%s2 + $0x27c] sm:$0xf]
    %v177 = vld [vmem:[%s2 + $0x280] sm:$0xf]
    %v178 = vld [vmem:[%s2 + $0x284] sm:$0xf]
    %v179 = vld [vmem:[%s2 + $0x288] sm:$0xf]
    %v180 = vld [vmem:[%s2 + $0x28c] sm:$0xf]
    %v181 = vld [vmem:[%s2 + $0x290] sm:$0xf]
    %v182 = vld [vmem:[%s2 + $0x294] sm:$0xf]
    %v183 = vld [vmem:[%s2 + $0x298] sm:$0xf]
    %v184 = vld [vmem:[%s2 + $0x29c] sm:$0xf]
    %v185 = vld [vmem:[%s2 + $0x2a0] sm:$0xf]
    %v186 = vld [vmem:[%s2 + $0x2a4] sm:$0xf]
    %v187 = vld [vmem:[%s2 + $0x2a8] sm:$0xf]
    %v188 = vld [vmem:[%s2 + $0x2ac] sm:$0xf]
    %v189 = vld [vmem:[%s2 + $0x2b0] sm:$0xf]
    %v190 = vld [vmem:[%s2 + $0x2b4] sm:$0xf]
    %v191 = vld [vmem:[%s2 + $0x2b8] sm:$0xf]
    %v192 = vld [vmem:[%s2 + $0x2bc] sm:$0xf]
    %v193 = vld [vmem:[%s2 + $0x2c0] sm:$0xf]
    %v194 = vld [vmem:[%s2 + $0x2c4] sm:$0xf]
    %v195 = vld [vmem:[%s2 + $0x2c8] sm:$0xf]
    %v196 = vld [vmem:[%s2 + $0x2cc] sm:$0xf]
    %v197 = vld [vmem:[%s2 + $0x2d0] sm:$0xf]
    %v198 = vld [vmem:[%s2 + $0x2d4] sm:$0xf]
    %v199 = vld [vmem:[%s2 + $0x2d8] sm:$0xf]
    %v200 = vld [vmem:[%s2 + $0x2dc] sm:$0xf]
    %v201 = vld [vmem:[%s2 + $0x2e0] sm:$0xf]
    %v202 = vld [vmem:[%s2 + $0x2e4] sm:$0xf]
    %v203 = vld [vmem:[%s2 + $0x2e8] sm:$0xf]
    %v204 = vld [vmem:[%s2 + $0x2ec] sm:$0xf]
    %v205 = vld [vmem:[%s2 + $0x2f0] sm:$0xf]
    %v206 = vld [vmem:[%s2 + $0x2f4] sm:$0xf]
    %v207 = vld [vmem:[%s2 + $0x2f8] sm:$0xf]
    %v208 = vld [vmem:[%s2 + $0x2fc] sm:$0xf]
    %v209 = vld [vmem:[%s2 + $0x300] sm:$0xf]
    %v210 = vld [vmem:[%s2 + $0x304] sm:$0xf]
    %v211 = vld [vmem:[%s2 + $0x308] sm:$0xf]
    %v212 = vld [vmem:[%s2 + $0x30c] sm:$0xf]
    %v213 = vld [vmem:[%s2 + $0x310] sm:$0xf]
    %v214 = vld [vmem:[%s2 + $0x314] sm:$0xf]
    %v215 = vld [vmem:[%s2 + $0x318] sm:$0xf]
    %v216 = vld [vmem:[%s2 + $0x31c] sm:$0xf]
    %v217 = vld [vmem:[%s2 + $0x320] sm:$0xf]
    %v218 = vld [vmem:[%s2 + $0x324] sm:$0xf]
    %v219 = vld [vmem:[%s2 + $0x328] sm:$0xf]
    %v220 = vld [vmem:[%s2 + $0x32c] sm:$0xf]
    %v221 = vld [vmem:[%s2 + $0x330] sm:$0xf]
    %v222 = vld [vmem:[%s2 + $0x334] sm:$0xf]
    %v223 = vld [vmem:[%s2 + $0x338] sm:$0xf]
    %v224 = vld [vmem:[%s2 + $0x33c] sm:$0xf]
    %v225 = vld [vmem:[%s2 + $0x340] sm:$0xf]
    %v226 = vld [vmem:[%s2 + $0x344] sm:$0xf]
    %v227 = vld [vmem:[%s2 + $0x348] sm:$0xf]
    %v228 = vld [vmem:[%s2 + $0x34c] sm:$0xf]
    %v229 = vld [vmem:[%s2 + $0x350] sm:$0xf]
    %v230 = vld [vmem:[%s2 + $0x354] sm:$0xf]
    %v231 = vld [vmem:[%s2 + $0x358] sm:$0xf]
    %v232 = vld [vmem:[%s2 + $0x35c] sm:$0xf]
    %v233 = vld [vmem:[%s2 + $0x360] sm:$0xf]
    %v234 = vld [vmem:[%s2 + $0x364] sm:$0xf]
    %v235 = vld [vmem:[%s2 + $0x368] sm:$0xf]
    %v236 = vld [vmem:[%s2 + $0x36c] sm:$0xf]
    %v237 = vld [vmem:[%s2 + $0x370] sm:$0xf]
    %v238 = vld [vmem:[%s2 + $0x374] sm:$0xf]
    %v239 = vld [vmem:[%s2 + $0x378] sm:$0xf]
    %v240 = vld [vmem:[%s2 + $0x37c] sm:$0xf]
    %v241 = vld [vmem:[%s2 + $0x380] sm:$0xf]
    %v242 = vld [vmem:[%s2 + $0x384] sm:$0xf]
    %v243 = vld [vmem:[%s2 + $0x388] sm:$0xf]
    %v244 = vld [vmem:[%s2 + $0x38c] sm:$0xf]
    %v245 = vld [vmem:[%s2 + $0x390] sm:$0xf]
    %v246 = vld [vmem:[%s2 + $0x394] sm:$0xf]
    %v247 = vld [vmem:[%s2 + $0x398] sm:$0xf]
    %v248 = vld [vmem:[%s2 + $0x39c] sm:$0xf]
    %v249 = vld [vmem:[%s2 + $0x3a0] sm:$0xf]
    %v250 = vld [vmem:[%s2 + $0x3a4] sm:$0xf]
    %v251 = vld [vmem:[%s2 + $0x3a8] sm:$0xf]
    %v252 = vld [vmem:[%s2 + $0x3ac] sm:$0xf]
    %v253 = vld [vmem:[%s2 + $0x3b0] sm:$0xf]
    %v254 = vld [vmem:[%s2 + $0x3b4] sm:$0xf]
    %v255 = vld [vmem:[%s2 + $0x3b8] sm:$0xf]
    %v256 = vld [vmem:[%s2 + $0x3bc] sm:$0xf]
    %v257 = vld [vmem:[%s2 + $0x3c0] sm:$0xf]
    %v258 = vld [vmem:[%s2 + $0x3c4] sm:$0xf]
    %v259 = vld [vmem:[%s2 + $0x3c8] sm:$0xf]
    %v260 = vld [vmem:[%s2 + $0x3cc] sm:$0xf]
    %v261 = vld [vmem:[%s2 + $0x3d0] sm:$0xf]
    %v262 = vld [vmem:[%s2 + $0x3d4] sm:$0xf]
    %v263 = vld [vmem:[%s2 + $0x3d8] sm:$0xf]
    %v264 = vld [vmem:[%s2 + $0x3dc] sm:$0xf]
    %v265 = vld [vmem:[%s2 + $0x3e0] sm:$0xf]
    %v266 = vld [vmem:[%s2 + $0x3e4] sm:$0xf]
    %v267 = vld [vmem:[%s2 + $0x3e8] sm:$0xf]
    %v268 = vld [vmem:[%s2 + $0x3ec] sm:$0xf]
    %v269 = vld [vmem:[%s2 + $0x3f0] sm:$0xf]
    %v270 = vld [vmem:[%s2 + $0x3f4] sm:$0xf]
    %v271 = vld [vmem:[%s2 + $0x3f8] sm:$0xf]
    %v272 = vld [vmem:[%s2 + $0x3fc] sm:$0xf]
    %274 = vst [vmem:[#allocation1] ss:$9 sm:$0xff] %v15
    %v275 = vld [vmem:[#allocation1] sm:$0xff]
    %v276 = vld [vmem:[#allocation1 + $0x9] sm:$0xff]
    %v277 = vld [vmem:[#allocation1 + $0x12] sm:$0xff]
    %v278 = vld [vmem:[#allocation1 + $0x1b] sm:$0xff]
    %v279 = vld [vmem:[#allocation1 + $0x24] sm:$0xff]
    %v280 = vld [vmem:[#allocation1 + $0x2d] sm:$0xff]
    %v281 = vld [vmem:[#allocation1 + $0x36] sm:$0xff]
    %v282 = vld [vmem:[#allocation1 + $0x3f] sm:$0xff]
    %284 = vst [vmem:[#allocation1] ss:$9 sm:$0xff] %v16
    %v285 = vld [vmem:[#allocation1] sm:$0xff]
    %v286 = vld [vmem:[#allocation1 + $0x9] sm:$0xff]
    %v287 = vld [vmem:[#allocation1 + $0x12] sm:$0xff]
    %v288 = vld [vmem:[#allocation1 + $0x1b] sm:$0xff]
    %v289 = vld [vmem:[#allocation1 + $0x24] sm:$0xff]
    %v290 = vld [vmem:[#allocation1 + $0x2d] sm:$0xff]
    %v291 = vld [vmem:[#allocation1 + $0x36] sm:$0xff]
    %v292 = vld [vmem:[#allocation1 + $0x3f] sm:$0xff]
    %v565 = vunpack.c.l.b16 %v17
    %v566 = vunpack.c.l.b16 %v18
    %v567 = vunpack.c.l.b16 %v19
    %v568 = vunpack.c.l.b16 %v20
    %v569 = vunpack.c.l.b16 %v21
    %v570 = vunpack.c.l.b16 %v22
    %v571 = vunpack.c.l.b16 %v23
    %v572 = vunpack.c.l.b16 %v24
    %v573 = vunpack.c.l.b16 %v25
    %v574 = vunpack.c.l.b16 %v26
    %v575 = vunpack.c.l.b16 %v27
    %v576 = vunpack.c.l.b16 %v28
    %v577 = vunpack.c.l.b16 %v29
    %v578 = vunpack.c.l.b16 %v30
    %v579 = vunpack.c.l.b16 %v31
    %v580 = vunpack.c.l.b16 %v32
    %v581 = vunpack.c.l.b16 %v33
    %v582 = vunpack.c.l.b16 %v34
    %v583 = vunpack.c.l.b16 %v35
    %v584 = vunpack.c.l.b16 %v36
    %v585 = vunpack.c.l.b16 %v37
    %v586 = vunpack.c.l.b16 %v38
    %v587 = vunpack.c.l.b16 %v39
    %v588 = vunpack.c.l.b16 %v40
    %v589 = vunpack.c.l.b16 %v41
    %v590 = vunpack.c.l.b16 %v42
    %v591 = vunpack.c.l.b16 %v43
    %v592 = vunpack.c.l.b16 %v44
    %v593 = vunpack.c.l.b16 %v45
    %v594 = vunpack.c.l.b16 %v46
    %v595 = vunpack.c.l.b16 %v47
    %v596 = vunpack.c.l.b16 %v48
    %v597 = vunpack.c.l.b16 %v49
    %v598 = vunpack.c.l.b16 %v50
    %v599 = vunpack.c.l.b16 %v51
    %v600 = vunpack.c.l.b16 %v52
    %v601 = vunpack.c.l.b16 %v53
    %v602 = vunpack.c.l.b16 %v54
    %v603 = vunpack.c.l.b16 %v55
    %v604 = vunpack.c.l.b16 %v56
    %v605 = vunpack.c.l.b16 %v57
    %v606 = vunpack.c.l.b16 %v58
    %v607 = vunpack.c.l.b16 %v59
    %v608 = vunpack.c.l.b16 %v60
    %v609 = vunpack.c.l.b16 %v61
    %v610 = vunpack.c.l.b16 %v62
    %v611 = vunpack.c.l.b16 %v63
    %v612 = vunpack.c.l.b16 %v64
    %v613 = vunpack.c.l.b16 %v65
    %v614 = vunpack.c.l.b16 %v66
    %v615 = vunpack.c.l.b16 %v67
    %v616 = vunpack.c.l.b16 %v68
    %v617 = vunpack.c.l.b16 %v69
    %v618 = vunpack.c.l.b16 %v70
    %v619 = vunpack.c.l.b16 %v71
    %v620 = vunpack.c.l.b16 %v72
    %v621 = vunpack.c.l.b16 %v73
    %v622 = vunpack.c.l.b16 %v74
    %v623 = vunpack.c.l.b16 %v75
    %v624 = vunpack.c.l.b16 %v76
    %v625 = vunpack.c.l.b16 %v77
    %v626 = vunpack.c.l.b16 %v78
    %v627 = vunpack.c.l.b16 %v79
    %v628 = vunpack.c.l.b16 %v80
    %v629 = vunpack.c.l.b16 %v81
    %v630 = vunpack.c.l.b16 %v82
    %v631 = vunpack.c.l.b16 %v83
    %v632 = vunpack.c.l.b16 %v84
    %v633 = vunpack.c.l.b16 %v85
    %v634 = vunpack.c.l.b16 %v86
    %v635 = vunpack.c.l.b16 %v87
    %v636 = vunpack.c.l.b16 %v88
    %v637 = vunpack.c.l.b16 %v89
    %v638 = vunpack.c.l.b16 %v90
    %v639 = vunpack.c.l.b16 %v91
    %v640 = vunpack.c.l.b16 %v92
    %v641 = vunpack.c.l.b16 %v93
    %v642 = vunpack.c.l.b16 %v94
    %v643 = vunpack.c.l.b16 %v95
    %v644 = vunpack.c.l.b16 %v96
    %v645 = vunpack.c.l.b16 %v97
    %v646 = vunpack.c.l.b16 %v98
    %v647 = vunpack.c.l.b16 %v99
    %v648 = vunpack.c.l.b16 %v100
    %v649 = vunpack.c.l.b16 %v101
    %v650 = vunpack.c.l.b16 %v102
    %v651 = vunpack.c.l.b16 %v103
    %v652 = vunpack.c.l.b16 %v104
    %v653 = vunpack.c.l.b16 %v105
    %v654 = vunpack.c.l.b16 %v106
    %v655 = vunpack.c.l.b16 %v107
    %v656 = vunpack.c.l.b16 %v108
    %v657 = vunpack.c.l.b16 %v109
    %v658 = vunpack.c.l.b16 %v110
    %v659 = vunpack.c.l.b16 %v111
    %v660 = vunpack.c.l.b16 %v112
    %v661 = vunpack.c.l.b16 %v113
    %v662 = vunpack.c.l.b16 %v114
    %v663 = vunpack.c.l.b16 %v115
    %v664 = vunpack.c.l.b16 %v116
    %v665 = vunpack.c.l.b16 %v117
    %v666 = vunpack.c.l.b16 %v118
    %v667 = vunpack.c.l.b16 %v119
    %v668 = vunpack.c.l.b16 %v120
    %v669 = vunpack.c.l.b16 %v121
    %v670 = vunpack.c.l.b16 %v122
    %v671 = vunpack.c.l.b16 %v123
    %v672 = vunpack.c.l.b16 %v124
    %v673 = vunpack.c.l.b16 %v125
    %v674 = vunpack.c.l.b16 %v126
    %v675 = vunpack.c.l.b16 %v127
    %v676 = vunpack.c.l.b16 %v128
    %v677 = vunpack.c.l.b16 %v129
    %v678 = vunpack.c.l.b16 %v130
    %v679 = vunpack.c.l.b16 %v131
    %v680 = vunpack.c.l.b16 %v132
    %v681 = vunpack.c.l.b16 %v133
    %v682 = vunpack.c.l.b16 %v134
    %v683 = vunpack.c.l.b16 %v135
    %v684 = vunpack.c.l.b16 %v136
    %v685 = vunpack.c.l.b16 %v137
    %v686 = vunpack.c.l.b16 %v138
    %v687 = vunpack.c.l.b16 %v139
    %v688 = vunpack.c.l.b16 %v140
    %v689 = vunpack.c.l.b16 %v141
    %v690 = vunpack.c.l.b16 %v142
    %v691 = vunpack.c.l.b16 %v143
    %v692 = vunpack.c.l.b16 %v144
    %v693 = vunpack.c.l.b16 %v145
    %v694 = vunpack.c.l.b16 %v146
    %v695 = vunpack.c.l.b16 %v147
    %v696 = vunpack.c.l.b16 %v148
    %v697 = vunpack.c.l.b16 %v149
    %v698 = vunpack.c.l.b16 %v150
    %v699 = vunpack.c.l.b16 %v151
    %v700 = vunpack.c.l.b16 %v152
    %v701 = vunpack.c.l.b16 %v153
    %v702 = vunpack.c.l.b16 %v154
    %v703 = vunpack.c.l.b16 %v155
    %v704 = vunpack.c.l.b16 %v156
    %v705 = vunpack.c.l.b16 %v157
    %v706 = vunpack.c.l.b16 %v158
    %v707 = vunpack.c.l.b16 %v159
    %v708 = vunpack.c.l.b16 %v160
    %v709 = vunpack.c.l.b16 %v161
    %v710 = vunpack.c.l.b16 %v162
    %v711 = vunpack.c.l.b16 %v163
    %v712 = vunpack.c.l.b16 %v164
    %v713 = vunpack.c.l.b16 %v165
    %v714 = vunpack.c.l.b16 %v166
    %v715 = vunpack.c.l.b16 %v167
    %v716 = vunpack.c.l.b16 %v168
    %v717 = vunpack.c.l.b16 %v169
    %v718 = vunpack.c.l.b16 %v170
    %v719 = vunpack.c.l.b16 %v171
    %v720 = vunpack.c.l.b16 %v172
    %v721 = vunpack.c.l.b16 %v173
    %v722 = vunpack.c.l.b16 %v174
    %v723 = vunpack.c.l.b16 %v175
    %v724 = vunpack.c.l.b16 %v176
    %v725 = vunpack.c.l.b16 %v177
    %v726 = vunpack.c.l.b16 %v178
    %v727 = vunpack.c.l.b16 %v179
    %v728 = vunpack.c.l.b16 %v180
    %v729 = vunpack.c.l.b16 %v181
    %v730 = vunpack.c.l.b16 %v182
    %v731 = vunpack.c.l.b16 %v183
    %v732 = vunpack.c.l.b16 %v184
    %v733 = vunpack.c.l.b16 %v185
    %v734 = vunpack.c.l.b16 %v186
    %v735 = vunpack.c.l.b16 %v187
    %v736 = vunpack.c.l.b16 %v188
    %v737 = vunpack.c.l.b16 %v189
    %v738 = vunpack.c.l.b16 %v190
    %v739 = vunpack.c.l.b16 %v191
    %v740 = vunpack.c.l.b16 %v192
    %v741 = vunpack.c.l.b16 %v193
    %v742 = vunpack.c.l.b16 %v194
    %v743 = vunpack.c.l.b16 %v195
    %v744 = vunpack.c.l.b16 %v196
    %v745 = vunpack.c.l.b16 %v197
    %v746 = vunpack.c.l.b16 %v198
    %v747 = vunpack.c.l.b16 %v199
    %v748 = vunpack.c.l.b16 %v200
    %v749 = vunpack.c.l.b16 %v201
    %v750 = vunpack.c.l.b16 %v202
    %v751 = vunpack.c.l.b16 %v203
    %v752 = vunpack.c.l.b16 %v204
    %v753 = vunpack.c.l.b16 %v205
    %v754 = vunpack.c.l.b16 %v206
    %v755 = vunpack.c.l.b16 %v207
    %v756 = vunpack.c.l.b16 %v208
    %v757 = vunpack.c.l.b16 %v209
    %v758 = vunpack.c.l.b16 %v210
    %v759 = vunpack.c.l.b16 %v211
    %v760 = vunpack.c.l.b16 %v212
    %v761 = vunpack.c.l.b16 %v213
    %v762 = vunpack.c.l.b16 %v214
    %v763 = vunpack.c.l.b16 %v215
    %v764 = vunpack.c.l.b16 %v216
    %v765 = vunpack.c.l.b16 %v217
    %v766 = vunpack.c.l.b16 %v218
    %v767 = vunpack.c.l.b16 %v219
    %v768 = vunpack.c.l.b16 %v220
    %v769 = vunpack.c.l.b16 %v221
    %v770 = vunpack.c.l.b16 %v222
    %v771 = vunpack.c.l.b16 %v223
    %v772 = vunpack.c.l.b16 %v224
    %v773 = vunpack.c.l.b16 %v225
    %v774 = vunpack.c.l.b16 %v226
    %v775 = vunpack.c.l.b16 %v227
    %v776 = vunpack.c.l.b16 %v228
    %v777 = vunpack.c.l.b16 %v229
    %v778 = vunpack.c.l.b16 %v230
    %v779 = vunpack.c.l.b16 %v231
    %v780 = vunpack.c.l.b16 %v232
    %v781 = vunpack.c.l.b16 %v233
    %v782 = vunpack.c.l.b16 %v234
    %v783 = vunpack.c.l.b16 %v235
    %v784 = vunpack.c.l.b16 %v236
    %v785 = vunpack.c.l.b16 %v237
    %v786 = vunpack.c.l.b16 %v238
    %v787 = vunpack.c.l.b16 %v239
    %v788 = vunpack.c.l.b16 %v240
    %v789 = vunpack.c.l.b16 %v241
    %v790 = vunpack.c.l.b16 %v242
    %v791 = vunpack.c.l.b16 %v243
    %v792 = vunpack.c.l.b16 %v244
    %v793 = vunpack.c.l.b16 %v245
    %v794 = vunpack.c.l.b16 %v246
    %v795 = vunpack.c.l.b16 %v247
    %v796 = vunpack.c.l.b16 %v248
    %v797 = vunpack.c.l.b16 %v249
    %v798 = vunpack.c.l.b16 %v250
    %v799 = vunpack.c.l.b16 %v251
    %v800 = vunpack.c.l.b16 %v252
    %v801 = vunpack.c.l.b16 %v253
    %v802 = vunpack.c.l.b16 %v254
    %v803 = vunpack.c.l.b16 %v255
    %v804 = vunpack.c.l.b16 %v256
    %v805 = vunpack.c.l.b16 %v257
    %v806 = vunpack.c.l.b16 %v258
    %v807 = vunpack.c.l.b16 %v259
    %v808 = vunpack.c.l.b16 %v260
    %v809 = vunpack.c.l.b16 %v261
    %v810 = vunpack.c.l.b16 %v262
    %v811 = vunpack.c.l.b16 %v263
    %v812 = vunpack.c.l.b16 %v264
    %v813 = vunpack.c.l.b16 %v265
    %v814 = vunpack.c.l.b16 %v266
    %v815 = vunpack.c.l.b16 %v267
    %v816 = vunpack.c.l.b16 %v268
    %v817 = vunpack.c.l.b16 %v269
    %v818 = vunpack.c.l.b16 %v270
    %v819 = vunpack.c.l.b16 %v271
    %v820 = vunpack.c.l.b16 %v272
    %v821 = vpack.c.b16 %v566, %v565
    %v822 = vpack.c.b16 %v568, %v567
    %v823 = vpack.c.b16 %v570, %v569
    %v824 = vpack.c.b16 %v572, %v571
    %v825 = vpack.c.b16 %v574, %v573
    %v826 = vpack.c.b16 %v576, %v575
    %v827 = vpack.c.b16 %v578, %v577
    %v828 = vpack.c.b16 %v580, %v579
    %v829 = vpack.c.b16 %v582, %v581
    %v830 = vpack.c.b16 %v584, %v583
    %v831 = vpack.c.b16 %v586, %v585
    %v832 = vpack.c.b16 %v588, %v587
    %v833 = vpack.c.b16 %v590, %v589
    %v834 = vpack.c.b16 %v592, %v591
    %v835 = vpack.c.b16 %v594, %v593
    %v836 = vpack.c.b16 %v596, %v595
    %v837 = vpack.c.b16 %v598, %v597
    %v838 = vpack.c.b16 %v600, %v599
    %v839 = vpack.c.b16 %v602, %v601
    %v840 = vpack.c.b16 %v604, %v603
    %v841 = vpack.c.b16 %v606, %v605
    %v842 = vpack.c.b16 %v608, %v607
    %v843 = vpack.c.b16 %v610, %v609
    %v844 = vpack.c.b16 %v612, %v611
    %v845 = vpack.c.b16 %v614, %v613
    %v846 = vpack.c.b16 %v616, %v615
    %v847 = vpack.c.b16 %v618, %v617
    %v848 = vpack.c.b16 %v620, %v619
    %v849 = vpack.c.b16 %v622, %v621
    %v850 = vpack.c.b16 %v624, %v623
    %v851 = vpack.c.b16 %v626, %v625
    %v852 = vpack.c.b16 %v628, %v627
    %v853 = vpack.c.b16 %v630, %v629
    %v854 = vpack.c.b16 %v632, %v631
    %v855 = vpack.c.b16 %v634, %v633
    %v856 = vpack.c.b16 %v636, %v635
    %v857 = vpack.c.b16 %v638, %v637
    %v858 = vpack.c.b16 %v640, %v639
    %v859 = vpack.c.b16 %v642, %v641
    %v860 = vpack.c.b16 %v644, %v643
    %v861 = vpack.c.b16 %v646, %v645
    %v862 = vpack.c.b16 %v648, %v647
    %v863 = vpack.c.b16 %v650, %v649
    %v864 = vpack.c.b16 %v652, %v651
    %v865 = vpack.c.b16 %v654, %v653
    %v866 = vpack.c.b16 %v656, %v655
    %v867 = vpack.c.b16 %v658, %v657
    %v868 = vpack.c.b16 %v660, %v659
    %v869 = vpack.c.b16 %v662, %v661
    %v870 = vpack.c.b16 %v664, %v663
    %v871 = vpack.c.b16 %v666, %v665
    %v872 = vpack.c.b16 %v668, %v667
    %v873 = vpack.c.b16 %v670, %v669
    %v874 = vpack.c.b16 %v672, %v671
    %v875 = vpack.c.b16 %v674, %v673
    %v876 = vpack.c.b16 %v676, %v675
    %v877 = vpack.c.b16 %v678, %v677
    %v878 = vpack.c.b16 %v680, %v679
    %v879 = vpack.c.b16 %v682, %v681
    %v880 = vpack.c.b16 %v684, %v683
    %v881 = vpack.c.b16 %v686, %v685
    %v882 = vpack.c.b16 %v688, %v687
    %v883 = vpack.c.b16 %v690, %v689
    %v884 = vpack.c.b16 %v692, %v691
    %v885 = vpack.c.b16 %v694, %v693
    %v886 = vpack.c.b16 %v696, %v695
    %v887 = vpack.c.b16 %v698, %v697
    %v888 = vpack.c.b16 %v700, %v699
    %v889 = vpack.c.b16 %v702, %v701
    %v890 = vpack.c.b16 %v704, %v703
    %v891 = vpack.c.b16 %v706, %v705
    %v892 = vpack.c.b16 %v708, %v707
    %v893 = vpack.c.b16 %v710, %v709
    %v894 = vpack.c.b16 %v712, %v711
    %v895 = vpack.c.b16 %v714, %v713
    %v896 = vpack.c.b16 %v716, %v715
    %v897 = vpack.c.b16 %v718, %v717
    %v898 = vpack.c.b16 %v720, %v719
    %v899 = vpack.c.b16 %v722, %v721
    %v900 = vpack.c.b16 %v724, %v723
    %v901 = vpack.c.b16 %v726, %v725
    %v902 = vpack.c.b16 %v728, %v727
    %v903 = vpack.c.b16 %v730, %v729
    %v904 = vpack.c.b16 %v732, %v731
    %v905 = vpack.c.b16 %v734, %v733
    %v906 = vpack.c.b16 %v736, %v735
    %v907 = vpack.c.b16 %v738, %v737
    %v908 = vpack.c.b16 %v740, %v739
    %v909 = vpack.c.b16 %v742, %v741
    %v910 = vpack.c.b16 %v744, %v743
    %v911 = vpack.c.b16 %v746, %v745
    %v912 = vpack.c.b16 %v748, %v747
    %v913 = vpack.c.b16 %v750, %v749
    %v914 = vpack.c.b16 %v752, %v751
    %v915 = vpack.c.b16 %v754, %v753
    %v916 = vpack.c.b16 %v756, %v755
    %v917 = vpack.c.b16 %v758, %v757
    %v918 = vpack.c.b16 %v760, %v759
    %v919 = vpack.c.b16 %v762, %v761
    %v920 = vpack.c.b16 %v764, %v763
    %v921 = vpack.c.b16 %v766, %v765
    %v922 = vpack.c.b16 %v768, %v767
    %v923 = vpack.c.b16 %v770, %v769
    %v924 = vpack.c.b16 %v772, %v771
    %v925 = vpack.c.b16 %v774, %v773
    %v926 = vpack.c.b16 %v776, %v775
    %v927 = vpack.c.b16 %v778, %v777
    %v928 = vpack.c.b16 %v780, %v779
    %v929 = vpack.c.b16 %v782, %v781
    %v930 = vpack.c.b16 %v784, %v783
    %v931 = vpack.c.b16 %v786, %v785
    %v932 = vpack.c.b16 %v788, %v787
    %v933 = vpack.c.b16 %v790, %v789
    %v934 = vpack.c.b16 %v792, %v791
    %v935 = vpack.c.b16 %v794, %v793
    %v936 = vpack.c.b16 %v796, %v795
    %v937 = vpack.c.b16 %v798, %v797
    %v938 = vpack.c.b16 %v800, %v799
    %v939 = vpack.c.b16 %v802, %v801
    %v940 = vpack.c.b16 %v804, %v803
    %v941 = vpack.c.b16 %v806, %v805
    %v942 = vpack.c.b16 %v808, %v807
    %v943 = vpack.c.b16 %v810, %v809
    %v944 = vpack.c.b16 %v812, %v811
    %v945 = vpack.c.b16 %v814, %v813
    %v946 = vpack.c.b16 %v816, %v815
    %v947 = vpack.c.b16 %v818, %v817
    %v948 = vpack.c.b16 %v820, %v819
    %1077 = vmatpush.bf16.msra.mxu0 %v828
    %1078 = vmatpush.bf16.msra.mxu0 %v827
    %1079 = vmatpush.bf16.msra.mxu0 %v826
    %1080 = vmatpush.bf16.msra.mxu0 %v825
    %1081 = vmatpush.bf16.msra.mxu0 %v824
    %1082 = vmatpush.bf16.msra.mxu0 %v823
    %1083 = vmatpush.bf16.msra.mxu0 %v822
    %1084 = vmatpush.bf16.msra.mxu0 %v821
    %1085 = vmatmul.bf16.gmra.mxu0 %v275
    %v1086 = vpop.f32.mrf.mxu0
    %v1087 = vadd.f32 0.0, %v1086
    %v1088 = vpop.f32.mrf.mxu0
    %1089 = vdwg.mxu0
    %1090 = vmatpush.bf16.msra.mxu0 %v836
    %1091 = vmatpush.bf16.msra.mxu0 %v835
    %1092 = vmatpush.bf16.msra.mxu0 %v834
    %1093 = vmatpush.bf16.msra.mxu0 %v833
    %1094 = vmatpush.bf16.msra.mxu0 %v832
    %1095 = vmatpush.bf16.msra.mxu0 %v831
    %1096 = vmatpush.bf16.msra.mxu0 %v830
    %1097 = vmatpush.bf16.msra.mxu0 %v829
    %1098 = vmatmul.bf16.gmra.mxu0 %v276
    %v1099 = vpop.f32.mrf.mxu0
    %v1100 = vadd.f32 %v1087, %v1099
    %v1101 = vpop.f32.mrf.mxu0
    %1102 = vdwg.mxu0
    %1103 = vmatpush.bf16.msra.mxu0 %v844
    %1104 = vmatpush.bf16.msra.mxu0 %v843
    %1105 = vmatpush.bf16.msra.mxu0 %v842
    %1106 = vmatpush.bf16.msra.mxu0 %v841
    %1107 = vmatpush.bf16.msra.mxu0 %v840
    %1108 = vmatpush.bf16.msra.mxu0 %v839
    %1109 = vmatpush.bf16.msra.mxu0 %v838
    %1110 = vmatpush.bf16.msra.mxu0 %v837
    %1111 = vmatmul.bf16.gmra.mxu0 %v277
    %v1112 = vpop.f32.mrf.mxu0
    %v1113 = vadd.f32 %v1100, %v1112
    %v1114 = vpop.f32.mrf.mxu0
    %1115 = vdwg.mxu0
    %1116 = vmatpush.bf16.msra.mxu0 %v852
    %1117 = vmatpush.bf16.msra.mxu0 %v851
    %1118 = vmatpush.bf16.msra.mxu0 %v850
    %1119 = vmatpush.bf16.msra.mxu0 %v849
    %1120 = vmatpush.bf16.msra.mxu0 %v848
    %1121 = vmatpush.bf16.msra.mxu0 %v847
    %1122 = vmatpush.bf16.msra.mxu0 %v846
    %1123 = vmatpush.bf16.msra.mxu0 %v845
    %1124 = vmatmul.bf16.gmra.mxu0 %v278
    %v1125 = vpop.f32.mrf.mxu0
    %v1126 = vadd.f32 %v1113, %v1125
    %v1127 = vpop.f32.mrf.mxu0
    %1128 = vdwg.mxu0
    %1129 = vmatpush.bf16.msra.mxu0 %v860
    %1130 = vmatpush.bf16.msra.mxu0 %v859
    %1131 = vmatpush.bf16.msra.mxu0 %v858
    %1132 = vmatpush.bf16.msra.mxu0 %v857
    %1133 = vmatpush.bf16.msra.mxu0 %v856
    %1134 = vmatpush.bf16.msra.mxu0 %v855
    %1135 = vmatpush.bf16.msra.mxu0 %v854
    %1136 = vmatpush.bf16.msra.mxu0 %v853
    %1137 = vmatmul.bf16.gmra.mxu0 %v279
    %v1138 = vpop.f32.mrf.mxu0
    %v1139 = vadd.f32 %v1126, %v1138
    %v1140 = vpop.f32.mrf.mxu0
    %1141 = vdwg.mxu0
    %1142 = vmatpush.bf16.msra.mxu0 %v868
    %1143 = vmatpush.bf16.msra.mxu0 %v867
    %1144 = vmatpush.bf16.msra.mxu0 %v866
    %1145 = vmatpush.bf16.msra.mxu0 %v865
    %1146 = vmatpush.bf16.msra.mxu0 %v864
    %1147 = vmatpush.bf16.msra.mxu0 %v863
    %1148 = vmatpush.bf16.msra.mxu0 %v862
    %1149 = vmatpush.bf16.msra.mxu0 %v861
    %1150 = vmatmul.bf16.gmra.mxu0 %v280
    %v1151 = vpop.f32.mrf.mxu0
    %v1152 = vadd.f32 %v1139, %v1151
    %v1153 = vpop.f32.mrf.mxu0
    %1154 = vdwg.mxu0
    %1155 = vmatpush.bf16.msra.mxu0 %v876
    %1156 = vmatpush.bf16.msra.mxu0 %v875
    %1157 = vmatpush.bf16.msra.mxu0 %v874
    %1158 = vmatpush.bf16.msra.mxu0 %v873
    %1159 = vmatpush.bf16.msra.mxu0 %v872
    %1160 = vmatpush.bf16.msra.mxu0 %v871
    %1161 = vmatpush.bf16.msra.mxu0 %v870
    %1162 = vmatpush.bf16.msra.mxu0 %v869
    %1163 = vmatmul.bf16.gmra.mxu0 %v281
    %v1164 = vpop.f32.mrf.mxu0
    %v1165 = vadd.f32 %v1152, %v1164
    %v1166 = vpop.f32.mrf.mxu0
    %1167 = vdwg.mxu0
    %1168 = vmatpush.bf16.msra.mxu0 %v884
    %1169 = vmatpush.bf16.msra.mxu0 %v883
    %1170 = vmatpush.bf16.msra.mxu0 %v882
    %1171 = vmatpush.bf16.msra.mxu0 %v881
    %1172 = vmatpush.bf16.msra.mxu0 %v880
    %1173 = vmatpush.bf16.msra.mxu0 %v879
    %1174 = vmatpush.bf16.msra.mxu0 %v878
    %1175 = vmatpush.bf16.msra.mxu0 %v877
    %1176 = vmatmul.bf16.gmra.mxu0 %v282
    %v1177 = vpop.f32.mrf.mxu0
    %v1178 = vadd.f32 %v1165, %v1177
    %v1179 = vpop.f32.mrf.mxu0
    %1180 = vdwg.mxu0
    %1181 = vmatpush.bf16.msra.mxu0 %v892
    %1182 = vmatpush.bf16.msra.mxu0 %v891
    %1183 = vmatpush.bf16.msra.mxu0 %v890
    %1184 = vmatpush.bf16.msra.mxu0 %v889
    %1185 = vmatpush.bf16.msra.mxu0 %v888
    %1186 = vmatpush.bf16.msra.mxu0 %v887
    %1187 = vmatpush.bf16.msra.mxu0 %v886
    %1188 = vmatpush.bf16.msra.mxu0 %v885
    %1189 = vmatmul.bf16.gmra.mxu0 %v285
    %v1190 = vpop.f32.mrf.mxu0
    %v1191 = vadd.f32 %v1178, %v1190
    %v1192 = vpop.f32.mrf.mxu0
    %1193 = vdwg.mxu0
    %1194 = vmatpush.bf16.msra.mxu0 %v900
    %1195 = vmatpush.bf16.msra.mxu0 %v899
    %1196 = vmatpush.bf16.msra.mxu0 %v898
    %1197 = vmatpush.bf16.msra.mxu0 %v897
    %1198 = vmatpush.bf16.msra.mxu0 %v896
    %1199 = vmatpush.bf16.msra.mxu0 %v895
    %1200 = vmatpush.bf16.msra.mxu0 %v894
    %1201 = vmatpush.bf16.msra.mxu0 %v893
    %1202 = vmatmul.bf16.gmra.mxu0 %v286
    %v1203 = vpop.f32.mrf.mxu0
    %v1204 = vadd.f32 %v1191, %v1203
    %v1205 = vpop.f32.mrf.mxu0
    %1206 = vdwg.mxu0
    %1207 = vmatpush.bf16.msra.mxu0 %v908
    %1208 = vmatpush.bf16.msra.mxu0 %v907
    %1209 = vmatpush.bf16.msra.mxu0 %v906
    %1210 = vmatpush.bf16.msra.mxu0 %v905
    %1211 = vmatpush.bf16.msra.mxu0 %v904
    %1212 = vmatpush.bf16.msra.mxu0 %v903
    %1213 = vmatpush.bf16.msra.mxu0 %v902
    %1214 = vmatpush.bf16.msra.mxu0 %v901
    %1215 = vmatmul.bf16.gmra.mxu0 %v287
    %v1216 = vpop.f32.mrf.mxu0
    %v1217 = vadd.f32 %v1204, %v1216
    %v1218 = vpop.f32.mrf.mxu0
    %1219 = vdwg.mxu0
    %1220 = vmatpush.bf16.msra.mxu0 %v916
    %1221 = vmatpush.bf16.msra.mxu0 %v915
    %1222 = vmatpush.bf16.msra.mxu0 %v914
    %1223 = vmatpush.bf16.msra.mxu0 %v913
    %1224 = vmatpush.bf16.msra.mxu0 %v912
    %1225 = vmatpush.bf16.msra.mxu0 %v911
    %1226 = vmatpush.bf16.msra.mxu0 %v910
    %1227 = vmatpush.bf16.msra.mxu0 %v909
    %1228 = vmatmul.bf16.gmra.mxu0 %v288
    %v1229 = vpop.f32.mrf.mxu0
    %v1230 = vadd.f32 %v1217, %v1229
    %v1231 = vpop.f32.mrf.mxu0
    %1232 = vdwg.mxu0
    %1233 = vmatpush.bf16.msra.mxu0 %v924
    %1234 = vmatpush.bf16.msra.mxu0 %v923
    %1235 = vmatpush.bf16.msra.mxu0 %v922
    %1236 = vmatpush.bf16.msra.mxu0 %v921
    %1237 = vmatpush.bf16.msra.mxu0 %v920
    %1238 = vmatpush.bf16.msra.mxu0 %v919
    %1239 = vmatpush.bf16.msra.mxu0 %v918
    %1240 = vmatpush.bf16.msra.mxu0 %v917
    %1241 = vmatmul.bf16.gmra.mxu0 %v289
    %v1242 = vpop.f32.mrf.mxu0
    %v1243 = vadd.f32 %v1230, %v1242
    %v1244 = vpop.f32.mrf.mxu0
    %1245 = vdwg.mxu0
    %1246 = vmatpush.bf16.msra.mxu0 %v932
    %1247 = vmatpush.bf16.msra.mxu0 %v931
    %1248 = vmatpush.bf16.msra.mxu0 %v930
    %1249 = vmatpush.bf16.msra.mxu0 %v929
    %1250 = vmatpush.bf16.msra.mxu0 %v928
    %1251 = vmatpush.bf16.msra.mxu0 %v927
    %1252 = vmatpush.bf16.msra.mxu0 %v926
    %1253 = vmatpush.bf16.msra.mxu0 %v925
    %1254 = vmatmul.bf16.gmra.mxu0 %v290
    %v1255 = vpop.f32.mrf.mxu0
    %v1256 = vadd.f32 %v1243, %v1255
    %v1257 = vpop.f32.mrf.mxu0
    %1258 = vdwg.mxu0
    %1259 = vmatpush.bf16.msra.mxu0 %v940
    %1260 = vmatpush.bf16.msra.mxu0 %v939
    %1261 = vmatpush.bf16.msra.mxu0 %v938
    %1262 = vmatpush.bf16.msra.mxu0 %v937
    %1263 = vmatpush.bf16.msra.mxu0 %v936
    %1264 = vmatpush.bf16.msra.mxu0 %v935
    %1265 = vmatpush.bf16.msra.mxu0 %v934
    %1266 = vmatpush.bf16.msra.mxu0 %v933
    %1267 = vmatmul.bf16.gmra.mxu0 %v291
    %v1268 = vpop.f32.mrf.mxu0
    %v1269 = vadd.f32 %v1256, %v1268
    %v1270 = vpop.f32.mrf.mxu0
    %1271 = vdwg.mxu0
    %1272 = vmatpush.bf16.msra.mxu0 %v948
    %1273 = vmatpush.bf16.msra.mxu0 %v947
    %1274 = vmatpush.bf16.msra.mxu0 %v946
    %1275 = vmatpush.bf16.msra.mxu0 %v945
    %1276 = vmatpush.bf16.msra.mxu0 %v944
    %1277 = vmatpush.bf16.msra.mxu0 %v943
    %1278 = vmatpush.bf16.msra.mxu0 %v942
    %1279 = vmatpush.bf16.msra.mxu0 %v941
    %1280 = vmatmul.bf16.gmra.mxu0 %v292
    %v1281 = vpop.f32.mrf.mxu0
    %v1282 = vadd.f32 %v1269, %v1281
    %v1283 = vpop.f32.mrf.mxu0
    %1284 = vdwg.mxu0
    %v1285 = vld [vmem:[%s1] sm:$0x1]
    %v1286 = vld [vmem:[%s1 + $0x1] sm:$0x1]
    %v1287 = vperm.slane %v1285, 0
    %v1288 = vmul.f32 %v1282, %v1287
    %v1289 = vperm.slane %v1286, 0
    %v1290 = vadd.f32 %v1288, %v1289
    %v1291 = vld [vmem:[%s1 + $0x2] sm:$0x1]
    %v1292 = vperm.slane %v1291, 0
    %1294 = vrot.lane.b32.xlu0 %v1292, 8
    %v1295 = vpop.permute.xlu0 %1294
    %v1297 = vadd.f32 %v1282, %v1295
    %vm1298 = vcmask 123968
    %v1299 = vsel %vm1298, %v1297, -inf
    %1300 = vmax.xlane.f32.xlu0 %v1299
    %v1301 = vpop.xlane.xlu0 %1300
    %v1302 = vsub.f32 %v1297, %v1301
    %v1303 = vmul.f32 %v1302, 1.442695
    %v1304 = vpow.pop %v1303
    %1306 = vrot.lane.b32.xlu0 %v1304, 120
    %v1307 = vpop.permute.xlu0 %1306
    %vm1309 = vcmask 58368
    %v1310 = vsel %vm1309, %v1307, 0.0
    %1311 = vadd.xlane.f32.xlu0 %v1310
    %v1312 = vpop.xlane.xlu0 %1311
    %v1313 = vrcp.pop %v1312
    %v1314 = vmul.f32 %v1304, %v1313
    %1316 = vrot.lane.b32.xlu0 %v1314, 8
    %v1317 = vpop.permute.xlu0 %1316
    %vm1319 = vcmask 64512
    %v1320 = vsel %vm1319, %v1290, %v1297
    %vm1321 = vcmask 130048
    %v1322 = vsel %vm1321, %v1320, %v1317
    %vm1323 = vcmask 195584
    %v1324 = vsel %vm1323, %v1322, 0.0
    %1325 = vst [vmem:[#allocation2] sm:$0x3] %v1324
    // Predicated region
    $region14: #{tpu_custom_call.1} parent=1 // pred_check
      _
    $region15: #{tpu_custom_call.1} parent=1 // pred_check_branch
      %1327 = sbr.rel (0) target = $region17
    $region16: #{tpu_custom_call.1} parent=1 // pred_region
      %1329 = vsyncadd [#allocation3], 0
      %s1331 = sshll.u32 [#allocation2], 4
      %s1332 = int_to_ptr.vmem [resolvable:$true] %s1331
      %s1333 = sshll.u32 %s3, 4
      %s1334 = int_to_ptr.hbm [resolvable:$true] %s1333
      %1336 = dma.vmem_to_hbm [thread:$0]  %s1332, 32, %s1334, [#allocation3]
    $region17: #{tpu_custom_call.1} parent=1 // pred_fallthru
      _
    // Predicated region
    $region18: #{tpu_custom_call.1} parent=1 // pred_check
      _
    $region19: #{tpu_custom_call.1} parent=1 // pred_check_branch
      %1338 = sbr.rel (0) target = $region21
    $region20: #{tpu_custom_call.1} parent=1 // pred_region
      %1340 = dma.done [#allocation3], 32
    $region21: #{tpu_custom_call.1} parent=1 // pred_fallthru
      _
    %1341 = vsyncpa [#allocation3], 1

</llo_original>
